<compile_context>
chip_gen: v7x
topology: tpu7x:2x2x1
jax: 0.10.0
libtpu: 0.0.40
codegen_flags: <defaults>
</compile_context>

<pallas_src>
import jax
import jax.numpy as jnp
from jax import lax
from jax.experimental import pallas as pl
from jax.experimental.pallas import tpu as pltpu


def _hardsigmoid(v):
    # PyTorch nn.Hardsigmoid: relu6(v + 3) / 6
    return jnp.clip(v + 3.0, 0.0, 6.0) * (1.0 / 6.0)


def _tpu_vmem_budget():
    """Returns (vmem_limit_bytes for CompilerParams, wrapper planning budget).

    Per-generation: ~112 MiB / 84 MiB on v5e & v6e (128 MiB physical),
    ~56 MiB / 42 MiB on v7x (64 MiB physical).  Falls back to the v7x numbers
    if the query is unavailable (conservative on every generation).
    """
    try:
        cap = int(pltpu.get_tpu_info().vmem_capacity_bytes)
    except Exception:
        cap = 64 * 2**20
    vmem_limit = (cap * 7) // 8          # headroom for Mosaic internal scratch
    budget = (vmem_limit * 3) // 4       # planning margin (weights, vregs, ...)
    return int(vmem_limit), int(budget)


# ----------------------------------------------------------------------------
# Path A: fused single-pass kernel (whole spatial plane resident per batch el.)
# ----------------------------------------------------------------------------
def _se_fused_kernel(x_ref, w1_ref, b1_ref, w2_ref, b2_ref, o_ref):
    """x_ref / o_ref: (C, HW) plane for one batch element (N squeezed)."""
    x = x_ref[...]                                    # native dtype, no f32 copy
    hw = x.shape[-1]

    # Squeeze: spatial mean as a ones-vector dot on the MXU, f32 accumulation.
    # (If ever compute-exposed on v6e/v5e, jnp.sum(axis=-1) on the XLU is an
    # alternative; normally this is hidden under the HBM stream.)
    ones = jnp.ones((hw, 1), dtype=x.dtype)
    s = jnp.dot(x, ones, preferred_element_type=jnp.float32)       # (C, 1)
    m = s * (1.0 / hw)

    # fc1 (1x1 conv) + ReLU:   (Cs, C) @ (C, 1)
    h = jnp.dot(w1_ref[...].astype(jnp.float32), m,
                preferred_element_type=jnp.float32) + b1_ref[...].astype(jnp.float32)
    h = jnp.maximum(h, 0.0)

    # fc2 + Hardsigmoid:       (C, Cs) @ (Cs, 1)
    gate = jnp.dot(w2_ref[...].astype(jnp.float32), h,
                   preferred_element_type=jnp.float32) + b2_ref[...].astype(jnp.float32)
    gate = _hardsigmoid(gate)                                      # (C, 1)

    # Excite: per-channel (sublane) gate broadcast across the lane (HW) axis.
    o_ref[...] = x * gate.astype(x.dtype)


def _se_single_pass(x, w1, b1c, w2, b2c, vmem_limit):
    N, C, HW = x.shape
    Cs = w1.shape[0]
    itemsize = x.dtype.itemsize
    # TODO(synk): on v7x (64 MiB VMEM) with N <= 2, pipeline_mode=pl.Buffered(1)
    # on the x/out specs would halve the resident footprint (little overlap to
    # lose at tiny batch); left off here to keep one code path per generation.
    return pl.pallas_call(
        _se_fused_kernel,
        out_shape=jax.ShapeDtypeStruct((N, C, HW), x.dtype),
        grid_spec=pltpu.PrefetchScalarGridSpec(
            num_scalar_prefetch=0,
            grid=(N,),
            in_specs=[
                pl.BlockSpec((None, C, HW), lambda n: (n, 0, 0)),
                pl.BlockSpec((Cs, C), lambda n: (0, 0)),
                pl.BlockSpec((Cs, 1), lambda n: (0, 0)),
                pl.BlockSpec((C, Cs), lambda n: (0, 0)),
                pl.BlockSpec((C, 1), lambda n: (0, 0)),
            ],
            out_specs=pl.BlockSpec((None, C, HW), lambda n: (n, 0, 0)),
        ),
        compiler_params=pltpu.CompilerParams(
            dimension_semantics=("parallel",),
            vmem_limit_bytes=vmem_limit),
        cost_estimate=pl.CostEstimate(
            flops=int(N * (3 * C * HW + 4 * C * Cs)),
            transcendentals=0,
            bytes_accessed=int(2 * N * C * HW * itemsize)),
    )(x, w1, b1c, w2, b2c)


# ----------------------------------------------------------------------------
# Path B: channel-packed fused kernel for HW < 128 (lane-dense small planes)
# ----------------------------------------------------------------------------
def _make_se_packed_kernel(hw, g):
    """x is packed as (C//g, g*hw): packed[r, j*hw + p] == x[r*g + j, p]."""

    def kernel(x_ref, w1s_ref, b1_ref, w2s_ref, b2s_ref, o_ref):
        x = x_ref[...]                                # (Cg, g*hw) native dtype
        cg, ghw = x.shape

        # Segment-indicator (g*hw, g): 1 where lane l belongs to packed col k.
        lane = lax.broadcasted_iota(jnp.int32, (ghw, g), 0)
        col = lax.broadcasted_iota(jnp.int32, (ghw, g), 1)
        seg = jnp.logical_and(lane >= col * hw,
                              lane < (col + 1) * hw).astype(x.dtype)

        # Squeeze: per-channel sums for all g packed columns in one MXU dot.
        sums = jnp.dot(x, seg, preferred_element_type=jnp.float32)   # (Cg, g)
        m = sums * (1.0 / hw)

        # fc1 + ReLU on the packed layout (weights pre-split per packed column
        # on the host, so no in-kernel reshape/transpose is needed).
        h = b1_ref[...].astype(jnp.float32)                          # (Cs, 1)
        for j in range(g):
            h = h + jnp.dot(w1s_ref[j].astype(jnp.float32), m[:, j:j + 1],
                            preferred_element_type=jnp.float32)
        h = jnp.maximum(h, 0.0)

        # fc2 + Hardsigmoid, then broadcast each packed-column gate across its
        # hw lanes with cheap VPU selects (keeps the store lane-dense).
        lane_full = lax.broadcasted_iota(jnp.int32, (cg, ghw), 1)
        gate_full = jnp.zeros((cg, ghw), jnp.float32)
        for j in range(g):
            v = jnp.dot(w2s_ref[j].astype(jnp.float32), h,
                        preferred_element_type=jnp.float32)
            v = _hardsigmoid(v + b2s_ref[j].astype(jnp.float32))     # (Cg, 1)
            in_seg = jnp.logical_and(lane_full >= j * hw,
                                     lane_full < (j + 1) * hw)
            gate_full = jnp.where(in_seg, v, gate_full)

        o_ref[...] = x * gate_full.astype(x.dtype)

    return kernel


def _se_packed_fused(xp, w1s, b1c, w2s, b2s, hw, g, vmem_limit):
    N, Cg, GHW = xp.shape
    Cs = w1s.shape[1]
    itemsize = xp.dtype.itemsize
    return pl.pallas_call(
        _make_se_packed_kernel(hw, g),
        out_shape=jax.ShapeDtypeStruct((N, Cg, GHW), xp.dtype),
        grid_spec=pltpu.PrefetchScalarGridSpec(
            num_scalar_prefetch=0,
            grid=(N,),
            in_specs=[
                pl.BlockSpec((None, Cg, GHW), lambda n: (n, 0, 0)),
                pl.BlockSpec((g, Cs, Cg), lambda n: (0, 0, 0)),
                pl.BlockSpec((Cs, 1), lambda n: (0, 0)),
                pl.BlockSpec((g, Cg, Cs), lambda n: (0, 0, 0)),
                pl.BlockSpec((g, Cg, 1), lambda n: (0, 0, 0)),
            ],
            out_specs=pl.BlockSpec((None, Cg, GHW), lambda n: (n, 0, 0)),
        ),
        compiler_params=pltpu.CompilerParams(
            dimension_semantics=("parallel",),
            vmem_limit_bytes=vmem_limit),
        cost_estimate=pl.CostEstimate(
            flops=int(N * (4 * Cg * GHW + 4 * g * Cg * Cs)),
            transcendentals=0,
            bytes_accessed=int(2 * N * Cg * GHW * itemsize)),
    )(xp, w1s, b1c, w2s, b2s)


# ----------------------------------------------------------------------------
# Path C: two-pass HW-tiled fallback (pass 1 masked reduce, XLA MLP, pass 2)
# ----------------------------------------------------------------------------
def _make_sum_kernel(total_hw, tile_hw):
    def kernel(x_ref, s_ref):
        t = pl.program_id(1)

        @pl.when(t == 0)
        def _():
            s_ref[...] = jnp.zeros_like(s_ref)

        x = x_ref[...]                                 # (C, tile_hw) native dtype
        # Last tile may be partial: mask lanes past the true spatial extent so
        # undefined padding never contaminates the channel sums.
        lane = lax.broadcasted_iota(jnp.int32, x.shape, 1)
        valid = (t * tile_hw + lane) < total_hw
        x = jnp.where(valid, x, jnp.zeros_like(x))
        ones = jnp.ones((tile_hw, 1), dtype=x.dtype)
        s_ref[...] += jnp.dot(x, ones, preferred_element_type=jnp.float32)

    return kernel


def _se_excite_kernel(x_ref, g_ref, o_ref):
    x = x_ref[...]                                     # (C, tile_hw)
    o_ref[...] = x * g_ref[...].astype(x.dtype)        # (C, 1) gate over lanes


def _se_two_pass(x, w1, b1, w2, b2, tile_hw, vmem_limit):
    N, C, HW = x.shape
    T = -(-HW // tile_hw)                              # cdiv: partial last tile OK
    itemsize = x.dtype.itemsize

    sums = pl.pallas_call(
        _make_sum_kernel(HW, tile_hw),
        out_shape=jax.ShapeDtypeStruct((N, C, 1), jnp.float32),
        grid_spec=pltpu.PrefetchScalarGridSpec(
            num_scalar_prefetch=0,
            grid=(N, T),
            in_specs=[pl.BlockSpec((None, C, tile_hw), lambda n, t: (n, 0, t))],
            out_specs=pl.BlockSpec((None, C, 1), lambda n, t: (n, 0, 0)),
        ),
        compiler_params=pltpu.CompilerParams(
            dimension_semantics=("parallel", "arbitrary"),
            vmem_limit_bytes=vmem_limit),
        cost_estimate=pl.CostEstimate(
            flops=int(2 * N * C * HW), transcendentals=0,
            bytes_accessed=int(N * C * HW * itemsize)),
    )(x)

    # Tiny gate MLP for the whole batch as one batched XLA matmul: keeps the
    # weights/bias blocks (and their VMEM residency) out of the streaming
    # reduction kernel and replaces N single-column dots with one matmul.
    m = sums[:, :, 0] * (1.0 / HW)                                   # (N, C) f32
    h = jnp.maximum(m @ w1.T.astype(jnp.float32) + b1.astype(jnp.float32), 0.0)
    gate = _hardsigmoid(h @ w2.T.astype(jnp.float32) + b2.astype(jnp.float32))
    gates = gate.astype(jnp.float32).reshape(N, C, 1)

    # TODO(synk): on v7x at batch 1, add a parallel C-tile grid axis here so
    # both TensorCores / DMA pipelines stay busy for the store-heavy pass.
    return pl.pallas_call(
        _se_excite_kernel,
        out_shape=jax.ShapeDtypeStruct((N, C, HW), x.dtype),
        grid_spec=pltpu.PrefetchScalarGridSpec(
            num_scalar_prefetch=0,
            grid=(N, T),
            in_specs=[
                pl.BlockSpec((None, C, tile_hw), lambda n, t: (n, 0, t)),
                pl.BlockSpec((None, C, 1), lambda n, t: (n, 0, 0)),
            ],
            out_specs=pl.BlockSpec((None, C, tile_hw), lambda n, t: (n, 0, t)),
        ),
        compiler_params=pltpu.CompilerParams(
            dimension_semantics=("parallel", "parallel"),
            vmem_limit_bytes=vmem_limit),
        cost_estimate=pl.CostEstimate(
            flops=int(N * C * HW), transcendentals=0,
            bytes_accessed=int(2 * N * C * HW * itemsize)),
    )(x, gates)


# ----------------------------------------------------------------------------
# Wrapper: path selection
# ----------------------------------------------------------------------------
def _pick_tile_hw(hw, c, itemsize, budget_bytes):
    """Largest multiple-of-128 lane tile (512-2048 preferred, capped at the
    spatial extent) whose double-buffered in+out footprint fits the budget."""
    cap = min(2048, max(128, (hw // 128) * 128))
    best = 128
    t = 128
    while t <= cap:
        if 4 * c * t * itemsize <= budget_bytes:
            best = t
        t += 128
    return best


def _pick_pack_factor(c, hw, max_g=8, lane_target=128, lane_cap=1024):
    """Smallest channel-packing factor g (divides C, <= max_g) whose packed
    lane width g*hw reaches the vreg lane target; None if no usable divisor."""
    divs = [d for d in range(2, max_g + 1) if c % d == 0 and d * hw <= lane_cap]
    if not divs:
        return None
    for d in divs:
        if d * hw >= lane_target:
            return d
    return divs[-1]


def squeeze_excitation(x_nchw, w1, b1, w2, b2, *, force_path=None):
    """MobileNetV3 SqueezeExcitation forward.

    x_nchw: (N, C, H, W)
    w1: (Cs, C) == fc1 Conv2d weight (Cs, C, 1, 1) squeezed;  b1: (Cs,)
    w2: (C, Cs) == fc2 Conv2d weight (C, Cs, 1, 1) squeezed;  b2: (C,)
    force_path: None (auto) | "fused" | "packed" | "two_pass"  (testing only)
    """
    N, C, H, W = x_nchw.shape
    Cs = w1.shape[0]
    HW = H * W
    itemsize = x_nchw.dtype.itemsize

    vmem_limit, budget = _tpu_vmem_budget()

    x = x_nchw.reshape(N, C, HW)          # NCHW kept as-is: no data movement
    b1c = b1.reshape(Cs, 1)
    b2c = b2.reshape(C, 1)

    plane_bytes = C * HW * itemsize
    fused_fits = 4 * plane_bytes + (1 << 20) <= budget   # 2x dbl-buffered planes

    g = _pick_pack_factor(C, HW)

    if force_path is not None:
        path = force_path
    elif HW < 128 and g is not None and fused_fits:
        path = "packed"
    elif fused_fits:
        path = "fused"
    else:
        path = "two_pass"
    if path == "packed" and g is None:
        path = "fused"

    if path == "two_pass":
        tile_hw = _pick_tile_hw(HW, C, itemsize, budget)
        out = _se_two_pass(x, w1, b1, w2, b2, tile_hw, vmem_limit)
    elif path == "packed":
        xp = x.reshape(N, C // g, g * HW)     # contiguous -> pure view reshape
        # Pre-split the 1x1-conv weights per packed column (host-side, once).
        w1s = jnp.stack([w1[:, j::g] for j in range(g)], axis=0)      # (g,Cs,C//g)
        w2s = jnp.stack([w2[j::g, :] for j in range(g)], axis=0)      # (g,C//g,Cs)
        b2s = jnp.stack([b2[j::g] for j in range(g)], axis=0)[..., None]
        out = _se_packed_fused(xp, w1s, b1c, w2s, b2s, HW, g, vmem_limit)
        out = out.reshape(N, C, HW)
    else:
        out = _se_single_pass(x, w1, b1c, w2, b2c, vmem_limit)

    return out.reshape(N, C, H, W)


def _reference(x_nchw, w1, b1, w2, b2):
    # pure-JAX reference of the PyTorch forward
    s = jnp.mean(x_nchw.astype(jnp.float32), axis=(-2, -1))          # (N, C)
    h = jnp.maximum(s @ w1.T + b1, 0.0)                              # (N, Cs)
    gate = jnp.clip(h @ w2.T + b2 + 3.0, 0.0, 6.0) / 6.0             # (N, C)
    return (x_nchw * gate[:, :, None, None].astype(x_nchw.dtype))


if __name__ == "__main__":
    key = jax.random.PRNGKey(0)

    def make_params(k, C, squeeze_factor=4):
        Cs = max(C // squeeze_factor, 1)
        k1, kb1, k2, kb2 = jax.random.split(k, 4)
        w1 = jax.random.normal(k1, (Cs, C), dtype=jnp.float32) * 0.5
        b1 = jax.random.normal(kb1, (Cs,), dtype=jnp.float32) * 0.1
        w2 = jax.random.normal(k2, (C, Cs), dtype=jnp.float32) * 0.5
        b2 = jax.random.normal(kb2, (C,), dtype=jnp.float32) * 0.1
        return w1, b1, w2, b2

    # 1) Fused single-pass path (HW = 256 >= 128, fits VMEM easily).
    kx, kp, key = jax.random.split(key, 3)
    x = jax.random.normal(kx, (2, 4, 16, 16), dtype=jnp.float32)
    w1, b1, w2, b2 = make_params(kp, 4)
    out = jax.block_until_ready(squeeze_excitation(x, w1, b1, w2, b2))
    assert out.shape == x.shape
    assert jnp.allclose(out, _reference(x, w1, b1, w2, b2),
                        atol=1e-5, rtol=1e-5), "fused mismatch"

    # 2) Two-pass tiled fallback with a partial (masked) last tile:
    #    HW = 144, tile = 128 -> T = 2, last tile has 16 valid lanes.
    kx, kp, key = jax.random.split(key, 3)
    x2 = jax.random.normal(kx, (2, 8, 12, 12), dtype=jnp.float32)
    w1, b1, w2, b2 = make_params(kp, 8)
    out2 = jax.block_until_ready(
        squeeze_excitation(x2, w1, b1, w2, b2, force_path="two_pass"))
    assert jnp.allclose(out2, _reference(x2, w1, b1, w2, b2),
                        atol=1e-5, rtol=1e-5), "two-pass mismatch"

    # 3) Channel-packed fused path (HW = 49 < 128, g = 4 -> 196 lanes/row).
    kx, kp, key = jax.random.split(key, 3)
    x3 = jax.random.normal(kx, (2, 8, 7, 7), dtype=jnp.float32)
    w1, b1, w2, b2 = make_params(kp, 8)
    out3 = jax.block_until_ready(squeeze_excitation(x3, w1, b1, w2, b2))
    assert jnp.allclose(out3, _reference(x3, w1, b1, w2, b2),
                        atol=1e-5, rtol=1e-5), "packed mismatch"

    print("KERNEL_OK")
</pallas_src>

<mosaic_0001>
module attributes {stable_mosaic.version = 11 : i64} {
  func.func @_se_fused_kernel(%arg0: i32, %arg1: memref<1x4x256xf32, #tpu.memory_space<vmem>>, %arg2: memref<1x4xf32, #tpu.memory_space<vmem>>, %arg3: memref<1x1xf32, #tpu.memory_space<vmem>>, %arg4: memref<4x1xf32, #tpu.memory_space<vmem>>, %arg5: memref<4x1xf32, #tpu.memory_space<vmem>>, %arg6: memref<1x4x256xf32, #tpu.memory_space<vmem>>) attributes {dimension_semantics = [#tpu.dimension_semantics<parallel>], iteration_bounds = array<i64: 2>, scalar_prefetch = 0 : i64, scratch_operands = 0 : i64, tpu.core_type = #tpu.core_type<tc>, window_params = [{transform_indices = @transform_0, window_bounds = array<i64: 1, 4, 256>}, {pipeline_mode = #tpu.pipeline_mode<synchronous>, transform_indices = @transform_1, window_bounds = array<i64: 1, 4>}, {pipeline_mode = #tpu.pipeline_mode<synchronous>, transform_indices = @transform_2, window_bounds = array<i64: 1, 1>}, {pipeline_mode = #tpu.pipeline_mode<synchronous>, transform_indices = @transform_3, window_bounds = array<i64: 4, 1>}, {pipeline_mode = #tpu.pipeline_mode<synchronous>, transform_indices = @transform_4, window_bounds = array<i64: 4, 1>}, {transform_indices = @transform_5, window_bounds = array<i64: 1, 4, 256>}]} {
    %c0 = arith.constant 0 : index
    %c0_0 = arith.constant 0 : index
    %c0_1 = arith.constant 0 : index
    %0 = vector.load %arg1[%c0, %c0_0, %c0_1] : memref<1x4x256xf32, #tpu.memory_space<vmem>>, vector<1x4x256xf32>
    %1 = vector.shape_cast %0 : vector<1x4x256xf32> to vector<4x256xf32>
    %cst = arith.constant 1.000000e+00 : f32
    %2 = vector.broadcast %cst : f32 to vector<256x1xf32>
    %cst_2 = arith.constant dense<0.000000e+00> : vector<4x1xf32>
    %3 = tpu.matmul %1, %2, %cst_2 {dimension_numbers = #tpu.dot_dimension_numbers<[1], [0], [0], [1], [0, 0, 1, 1], [], []>} : vector<4x256xf32>, vector<256x1xf32>, vector<4x1xf32> -> vector<4x1xf32>
    %cst_3 = arith.constant 3.906250e-03 : f32
    %4 = vector.broadcast %cst_3 : f32 to vector<4x1xf32>
    %5 = arith.mulf %3, %4 : vector<4x1xf32>
    %c0_4 = arith.constant 0 : index
    %c0_5 = arith.constant 0 : index
    %6 = vector.load %arg2[%c0_4, %c0_5] : memref<1x4xf32, #tpu.memory_space<vmem>>, vector<1x4xf32>
    %cst_6 = arith.constant dense<0.000000e+00> : vector<1x1xf32>
    %7 = tpu.matmul %6, %5, %cst_6 {dimension_numbers = #tpu.dot_dimension_numbers<[1], [0], [0], [1], [0, 0, 1, 1], [], []>} : vector<1x4xf32>, vector<4x1xf32>, vector<1x1xf32> -> vector<1x1xf32>
    %c0_7 = arith.constant 0 : index
    %c0_8 = arith.constant 0 : index
    %8 = vector.load %arg3[%c0_7, %c0_8] : memref<1x1xf32, #tpu.memory_space<vmem>>, vector<1x1xf32>
    %9 = arith.addf %7, %8 : vector<1x1xf32>
    %cst_9 = arith.constant 0.000000e+00 : f32
    %10 = vector.broadcast %cst_9 : f32 to vector<1x1xf32>
    %11 = arith.maximumf %9, %10 : vector<1x1xf32>
    %c0_10 = arith.constant 0 : index
    %c0_11 = arith.constant 0 : index
    %12 = vector.load %arg4[%c0_10, %c0_11] : memref<4x1xf32, #tpu.memory_space<vmem>>, vector<4x1xf32>
    %cst_12 = arith.constant dense<0.000000e+00> : vector<4x1xf32>
    %13 = tpu.matmul %12, %11, %cst_12 {dimension_numbers = #tpu.dot_dimension_numbers<[1], [0], [0], [1], [0, 0, 1, 1], [], []>} : vector<4x1xf32>, vector<1x1xf32>, vector<4x1xf32> -> vector<4x1xf32>
    %c0_13 = arith.constant 0 : index
    %c0_14 = arith.constant 0 : index
    %14 = vector.load %arg5[%c0_13, %c0_14] : memref<4x1xf32, #tpu.memory_space<vmem>>, vector<4x1xf32>
    %15 = arith.addf %13, %14 : vector<4x1xf32>
    %cst_15 = arith.constant 3.000000e+00 : f32
    %16 = vector.broadcast %cst_15 : f32 to vector<4x1xf32>
    %17 = arith.addf %15, %16 : vector<4x1xf32>
    %cst_16 = arith.constant 0.000000e+00 : f32
    %cst_17 = arith.constant 6.000000e+00 : f32
    %18 = vector.broadcast %cst_16 : f32 to vector<4x1xf32>
    %19 = arith.maximumf %18, %17 : vector<4x1xf32>
    %20 = vector.broadcast %cst_17 : f32 to vector<4x1xf32>
    %21 = arith.minimumf %20, %19 : vector<4x1xf32>
    %cst_18 = arith.constant 0.166666672 : f32
    %22 = vector.broadcast %cst_18 : f32 to vector<4x1xf32>
    %23 = arith.mulf %21, %22 : vector<4x1xf32>
    %24 = vector.broadcast %23 : vector<4x1xf32> to vector<4x256xf32>
    %25 = arith.mulf %1, %24 : vector<4x256xf32>
    %c0_19 = arith.constant 0 : index
    %c0_20 = arith.constant 0 : index
    %c0_21 = arith.constant 0 : index
    %26 = vector.load %arg6[%c0_19, %c0_20, %c0_21] : memref<1x4x256xf32, #tpu.memory_space<vmem>>, vector<1x4x256xf32>
    %27 = vector.shape_cast %26 : vector<1x4x256xf32> to vector<4x256xf32>
    %28 = vector.shape_cast %25 : vector<4x256xf32> to vector<1x4x256xf32>
    tpu.vector_store %arg6[%c0_19, %c0_20, %c0_21], %28 {strides = array<i32>} : memref<1x4x256xf32, #tpu.memory_space<vmem>>, vector<1x4x256xf32>,
    return
  }
  func.func @transform_0(%arg0: i32) -> (i32, i32, i32) {
    %c0_i32 = arith.constant 0 : i32
    %c0_i32_0 = arith.constant 0 : i32
    %c0_i32_1 = arith.constant 0 : i32
    return %arg0, %c0_i32, %c0_i32_0 : i32, i32, i32
  }
  func.func @transform_1(%arg0: i32) -> (i32, i32) {
    %c0_i32 = arith.constant 0 : i32
    %c0_i32_0 = arith.constant 0 : i32
    %c0_i32_1 = arith.constant 0 : i32
    return %c0_i32, %c0_i32_0 : i32, i32
  }
  func.func @transform_2(%arg0: i32) -> (i32, i32) {
    %c0_i32 = arith.constant 0 : i32
    %c0_i32_0 = arith.constant 0 : i32
    %c0_i32_1 = arith.constant 0 : i32
    return %c0_i32, %c0_i32_0 : i32, i32
  }
  func.func @transform_3(%arg0: i32) -> (i32, i32) {
    %c0_i32 = arith.constant 0 : i32
    %c0_i32_0 = arith.constant 0 : i32
    %c0_i32_1 = arith.constant 0 : i32
    return %c0_i32, %c0_i32_0 : i32, i32
  }
  func.func @transform_4(%arg0: i32) -> (i32, i32) {
    %c0_i32 = arith.constant 0 : i32
    %c0_i32_0 = arith.constant 0 : i32
    %c0_i32_1 = arith.constant 0 : i32
    return %c0_i32, %c0_i32_0 : i32, i32
  }
  func.func @transform_5(%arg0: i32) -> (i32, i32, i32) {
    %c0_i32 = arith.constant 0 : i32
    %c0_i32_0 = arith.constant 0 : i32
    %c0_i32_1 = arith.constant 0 : i32
    return %arg0, %c0_i32, %c0_i32_0 : i32, i32, i32
  }
}

</mosaic_0001>

<llo_original>
// kernel: tpu_custom_call.1
$region0: #{tpu_custom_call.1}
  #allocation0 [shape = 'u32[]', space=smem, size = 0x4, offset = 0x4, fixed_abs, tag = 'smem constant byte address 0x4 - core index']
  #allocation1 [shape = 'u32[144,128]{1,0:T(1,128)}', space=vmem, size = 0x12000, scoped, tag = 'internal scratch']
  #allocation2 [shape = 'f32[1,1]{1,0:T(1,128)S(1)}', space=vmem, size = 0x200, scoped, tag = 'scoped memory for tpu_custom_call.1']
  %s0 = inlined_call_operand.hbm [shape: f32[2,4,256], index: 0, kind: input, shape index: {}]
  %s1 = inlined_call_operand.vmem [shape: f32[1,4], index: 1, kind: input, shape index: {}]
  %s2 = inlined_call_operand.<no memory space> [shape: f32[1,1], index: 2, kind: input, shape index: {}]
  %s3 = inlined_call_operand.vmem [shape: f32[4,1], index: 3, kind: input, shape index: {}]
  %s4 = inlined_call_operand.vmem [shape: f32[4,1], index: 4, kind: input, shape index: {}]
  %s5 = inlined_call_operand.hbm [shape: f32[2,4,256], index: 5, kind: output, shape index: {}]
  %s6 = sld [smem:[#allocation0]]
  $region57: #{tpu_custom_call.1} parent=0
    _
  %s8 = ssub.s32 1, %s6
  %s9 = scalar_select 0, %s8, %s6
  %v10 = vstv %s2
  %11 = vst [vmem:[#allocation2] sm:$0x1] %v10
  $region1: #{tpu_custom_call.1} parent=0
    #allocation3 [shape = 'u8[8192]{0}', space=vmem, size = 0x2000, scoped, tag = 'input window, operand 0']
    #allocation4 [shape = 's32[2]{0}', space=sflag, size = 0x8, scoped, tag = 'scoped memory for tpu_custom_call.1']
    #allocation5 [shape = 's32[2]{0}', space=sflag, size = 0x8, scoped, tag = 'scoped memory for tpu_custom_call.1']
    #allocation6 [shape = 'u8[8192]{0}', space=vmem, size = 0x2000, scoped, tag = 'output window, operand 0']
    %12 = vsyncpa [#allocation4], 0
    %s13 = scalar_lea.sflag [#allocation4], 1
    %14 = vsyncpa %s13, 0
    %15 = vsyncpa [#allocation5], 0
    %s16 = scalar_lea.sflag [#allocation5], 1
    %17 = vsyncpa %s16, 0
    loop: start=0, step=1, limit=4
    $region2: #{tpu_custom_call.1} parent=1 // loop_pre_header
      _
    $region3: #{tpu_custom_call.1} parent=1 // loop_header
      %s19 = sphi 0, %s23
      %p20 = scmp.ge.s32.totalorder %s19, 4
      %s29 = sphi 0, %s31
      %s32 = sphi 0, %s29
      %s33 = sphi 0, %s32
      %s49 = sphi 0, %s33
      %s53 = sphi 0, %s53
      %s55 = sphi 0, %s53
      %s56 = sphi 0, %s55
      %s70 = sphi 0, %s56
      %s74 = sphi 0, %s74
      %s76 = sphi 0, %s74
      %s77 = sphi 0, %s76
      %s91 = sphi 0, %s77
      %s95 = sphi 0, %s95
      %s97 = sphi 0, %s95
      %s98 = sphi 0, %s97
      %s112 = sphi 0, %s98
      %s116 = sphi 0, %s116
      %s118 = sphi 0, %s116
      %s119 = sphi 0, %s118
      %s133 = sphi 0, %s119
      %s139 = sphi 0, %s141
      %s142 = sphi 0, %s139
      %s143 = sphi 0, %s142
      %s159 = sphi 0, %s143
    $region4: #{tpu_custom_call.1} parent=1 // loop_header_branch
      %22 = sbr.rel (%p20) target = $region8
    $region5: #{tpu_custom_call.1} parent=1 // loop_body
      %s24 = ssub.s32 %s19, 1
      %s25 = ssub.s32 %s19, 2
      %s26 = sadd.s32 %s19, 1
      %s27 = ssub.s32 %s19, %s26
      %p28 = scmp.eq.s32.totalorder %s27, 0
      %s30 = sadd.s32 %s29, 1
      %s31 = scalar_select %p28, %s29, %s30
      %p34 = pneg %p28
      %p35 = scmp.eq.s32.totalorder %s19, 1
      %p36 = por %p34, %p35
      %p37 = scmp.ne.s32.totalorder %s29, %s32
      %p38 = scmp.eq.s32.totalorder %s19, 0
      %p39 = por %p37, %p38
      %p40 = scmp.ne.s32.totalorder %s29, %s32
      %p41 = scmp.eq.s32.totalorder %s24, 1
      %p42 = por %p40, %p41
      %p43 = scmp.ne.s32.totalorder %s32, %s33
      %p44 = scmp.eq.s32.totalorder %s24, 0
      %p45 = por %p43, %p44
      %p46 = scmp.ne.s32.totalorder %s32, %s33
      %p47 = scmp.eq.s32.totalorder %s25, 1
      %p48 = por %p46, %p47
      %p50 = scmp.ne.s32.totalorder %s33, %s49
      %p51 = scmp.eq.s32.totalorder %s25, 0
      %p52 = por %p50, %p51
      %s54 = sadd.s32 %s53, 1
      %p57 = scmp.eq.s32.totalorder %s19, 1
      %p58 = scmp.ne.s32.totalorder %s53, %s55
      %p59 = scmp.eq.s32.totalorder %s19, 0
      %p60 = por %p58, %p59
      %p61 = scmp.ne.s32.totalorder %s53, %s55
      %p62 = scmp.eq.s32.totalorder %s24, 1
      %p63 = por %p61, %p62
      %p64 = scmp.ne.s32.totalorder %s55, %s56
      %p65 = scmp.eq.s32.totalorder %s24, 0
      %p66 = por %p64, %p65
      %p67 = scmp.ne.s32.totalorder %s55, %s56
      %p68 = scmp.eq.s32.totalorder %s25, 1
      %p69 = por %p67, %p68
      %p71 = scmp.ne.s32.totalorder %s56, %s70
      %p72 = scmp.eq.s32.totalorder %s25, 0
      %p73 = por %p71, %p72
      %s75 = sadd.s32 %s74, 1
      %p78 = scmp.eq.s32.totalorder %s19, 1
      %p79 = scmp.ne.s32.totalorder %s74, %s76
      %p80 = scmp.eq.s32.totalorder %s19, 0
      %p81 = por %p79, %p80
      %p82 = scmp.ne.s32.totalorder %s74, %s76
      %p83 = scmp.eq.s32.totalorder %s24, 1
      %p84 = por %p82, %p83
      %p85 = scmp.ne.s32.totalorder %s76, %s77
      %p86 = scmp.eq.s32.totalorder %s24, 0
      %p87 = por %p85, %p86
      %p88 = scmp.ne.s32.totalorder %s76, %s77
      %p89 = scmp.eq.s32.totalorder %s25, 1
      %p90 = por %p88, %p89
      %p92 = scmp.ne.s32.totalorder %s77, %s91
      %p93 = scmp.eq.s32.totalorder %s25, 0
      %p94 = por %p92, %p93
      %s96 = sadd.s32 %s95, 1
      %p99 = scmp.eq.s32.totalorder %s19, 1
      %p100 = scmp.ne.s32.totalorder %s95, %s97
      %p101 = scmp.eq.s32.totalorder %s19, 0
      %p102 = por %p100, %p101
      %p103 = scmp.ne.s32.totalorder %s95, %s97
      %p104 = scmp.eq.s32.totalorder %s24, 1
      %p105 = por %p103, %p104
      %p106 = scmp.ne.s32.totalorder %s97, %s98
      %p107 = scmp.eq.s32.totalorder %s24, 0
      %p108 = por %p106, %p107
      %p109 = scmp.ne.s32.totalorder %s97, %s98
      %p110 = scmp.eq.s32.totalorder %s25, 1
      %p111 = por %p109, %p110
      %p113 = scmp.ne.s32.totalorder %s98, %s112
      %p114 = scmp.eq.s32.totalorder %s25, 0
      %p115 = por %p113, %p114
      %s117 = sadd.s32 %s116, 1
      %p120 = scmp.eq.s32.totalorder %s19, 1
      %p121 = scmp.ne.s32.totalorder %s116, %s118
      %p122 = scmp.eq.s32.totalorder %s19, 0
      %p123 = por %p121, %p122
      %p124 = scmp.ne.s32.totalorder %s116, %s118
      %p125 = scmp.eq.s32.totalorder %s24, 1
      %p126 = por %p124, %p125
      %p127 = scmp.ne.s32.totalorder %s118, %s119
      %p128 = scmp.eq.s32.totalorder %s24, 0
      %p129 = por %p127, %p128
      %p130 = scmp.ne.s32.totalorder %s118, %s119
      %p131 = scmp.eq.s32.totalorder %s25, 1
      %p132 = por %p130, %p131
      %p134 = scmp.ne.s32.totalorder %s119, %s133
      %p135 = scmp.eq.s32.totalorder %s25, 0
      %p136 = por %p134, %p135
      %s137 = ssub.s32 %s19, %s26
      %p138 = scmp.eq.s32.totalorder %s137, 0
      %s140 = sadd.s32 %s139, 1
      %s141 = scalar_select %p138, %s139, %s140
      %p144 = pneg %p138
      %p145 = scmp.eq.s32.totalorder %s19, 1
      %p146 = por %p144, %p145
      %p147 = scmp.ne.s32.totalorder %s139, %s142
      %p148 = scmp.eq.s32.totalorder %s19, 0
      %p149 = por %p147, %p148
      %p150 = scmp.ne.s32.totalorder %s139, %s142
      %p151 = scmp.eq.s32.totalorder %s24, 1
      %p152 = por %p150, %p151
      %p153 = scmp.ne.s32.totalorder %s142, %s143
      %p154 = scmp.eq.s32.totalorder %s24, 0
      %p155 = por %p153, %p154
      %p156 = scmp.ne.s32.totalorder %s142, %s143
      %p157 = scmp.eq.s32.totalorder %s25, 1
      %p158 = por %p156, %p157
      %p160 = scmp.ne.s32.totalorder %s143, %s159
      %p161 = scmp.eq.s32.totalorder %s25, 0
      %p162 = por %p160, %p161
      %p163 = scmp.le.s32.totalorder 1, %s19
      %p164 = scmp.lt.s32.totalorder %s19, 3
      %p165 = pnand %p163, %p164
      %p166 = pneg %p165
      // Predicated region
      $region9: #{tpu_custom_call.1} parent=5 // pred_check
        _
      $region10: #{tpu_custom_call.1} parent=5 // pred_check_branch
        %168 = sbr.rel (%p165) target = $region12
      $region11: #{tpu_custom_call.1} parent=5 // pred_region
        %s169 = ssub.s32 %s19, 1
        // Predicated region
        $region13: #{tpu_custom_call.1} parent=11 // pred_check
          %p170 = pneg %p66
        $region14: #{tpu_custom_call.1} parent=11 // pred_check_branch
          %172 = sbr.rel (%p170) target = $region16
        $region15: #{tpu_custom_call.1} parent=11 // pred_region
          _
        $region16: #{tpu_custom_call.1} parent=11 // pred_fallthru
          _
        // Predicated region
        $region17: #{tpu_custom_call.1} parent=11 // pred_check
          %p173 = pneg %p87
        $region18: #{tpu_custom_call.1} parent=11 // pred_check_branch
          %175 = sbr.rel (%p173) target = $region20
        $region19: #{tpu_custom_call.1} parent=11 // pred_region
          _
        $region20: #{tpu_custom_call.1} parent=11 // pred_fallthru
          _
        // Predicated region
        $region21: #{tpu_custom_call.1} parent=11 // pred_check
          %p176 = pneg %p108
        $region22: #{tpu_custom_call.1} parent=11 // pred_check_branch
          %178 = sbr.rel (%p176) target = $region24
        $region23: #{tpu_custom_call.1} parent=11 // pred_region
          _
        $region24: #{tpu_custom_call.1} parent=11 // pred_fallthru
          _
        // Predicated region
        $region25: #{tpu_custom_call.1} parent=11 // pred_check
          %p179 = pneg %p129
        $region26: #{tpu_custom_call.1} parent=11 // pred_check_branch
          %181 = sbr.rel (%p179) target = $region28
        $region27: #{tpu_custom_call.1} parent=11 // pred_region
          _
        $region28: #{tpu_custom_call.1} parent=11 // pred_fallthru
          _
      $region12: #{tpu_custom_call.1} parent=5 // pred_fallthru
        _
      %p182 = scmp.lt.s32.totalorder %s19, 2
      // Predicated region
      $region29: #{tpu_custom_call.1} parent=5 // pred_check
        %p183 = pneg %p182
      $region30: #{tpu_custom_call.1} parent=5 // pred_check_branch
        %185 = sbr.rel (%p183) target = $region32
      $region31: #{tpu_custom_call.1} parent=5 // pred_region
        // Predicated region
        $region33: #{tpu_custom_call.1} parent=31 // pred_check
          %p186 = pneg %p39
        $region34: #{tpu_custom_call.1} parent=31 // pred_check_branch
          %188 = sbr.rel (%p186) target = $region36
        $region35: #{tpu_custom_call.1} parent=31 // pred_region
          %s189 = sand.u32 %s29, 1
          %s190 = scalar_lea.sflag [#allocation4], %s189
          %s191 = sand.u32 %s29, 1
          %s192 = smul.addr %s191, 8
          %s193 = scalar_lea.vmem [#allocation3], %s192
          %s195 = ssub.s32 128, 128
          %196 = vsyncadd %s190, %s195
          %s197 = smul.addr %s19, 2
          %s198 = smul.addr %s197, 64
          %s199 = scalar_lea.hbm %s0, %s198
          %s201 = sshll.u32 %s193, 4
          %s202 = int_to_ptr.vmem [resolvable:$true] %s201
          %204 = dma.hbm_to_vmem [thread:$0]  %s199, 128, %s202, %s190
        $region36: #{tpu_custom_call.1} parent=31 // pred_fallthru
          _
      $region32: #{tpu_custom_call.1} parent=5 // pred_fallthru
        _
      %p205 = scmp.le.s32.totalorder 1, %s19
      %p206 = scmp.lt.s32.totalorder %s19, 3
      %p207 = pnand %p205, %p206
      %p208 = pneg %p207
      // Predicated region
      $region37: #{tpu_custom_call.1} parent=5 // pred_check
        _
      $region38: #{tpu_custom_call.1} parent=5 // pred_check_branch
        %210 = sbr.rel (%p207) target = $region40
      $region39: #{tpu_custom_call.1} parent=5 // pred_region
        %s211 = ssub.s32 %s19, 1
        %s212 = sand.u32 %s32, 1
        %s213 = scalar_lea.sflag [#allocation4], %s212
        %s214 = sand.u32 %s32, 1
        %s215 = smul.addr %s214, 8
        %s216 = scalar_lea.vmem [#allocation3], %s215
        // Predicated region
        $region41: #{tpu_custom_call.1} parent=39 // pred_check
          %p217 = pneg %p45
        $region42: #{tpu_custom_call.1} parent=39 // pred_check_branch
          %219 = sbr.rel (%p217) target = $region44
        $region43: #{tpu_custom_call.1} parent=39 // pred_region
          %220 = dma.done %s213, 128
        $region44: #{tpu_custom_call.1} parent=39 // pred_fallthru
          _
        %s221 = sand.u32 %s32, 1
        %s222 = scalar_lea.sflag [#allocation4], %s221
        %s223 = sand.u32 %s32, 1
        %s224 = smul.addr %s223, 8
        %s225 = scalar_lea.vmem [#allocation3], %s224
        %p226 = pneg %p45
        %p227 = pneg %p42
        %p228 = pneg %p66
        %p229 = pneg %p63
        %p230 = pneg %p87
        %p231 = pneg %p84
        %p232 = pneg %p108
        %p233 = pneg %p105
        %p234 = pneg %p129
        %p235 = pneg %p126
        %p236 = pneg %p155
        %p237 = pneg %p152
        %s238 = sand.u32 %s142, 1
        %s239 = scalar_lea.sflag [#allocation5], %s238
        %s240 = sand.u32 %s142, 1
        %s241 = smul.addr %s240, 8
        %s242 = scalar_lea.vmem [#allocation6], %s241
        %v243 = vld [vmem:[%s216] sm:$0xff]
        %v245 = vcombine.high %v243, %v243
        %247 = vmatprep.subr.mxu0 0.0
        %248 = vmatpush1.msra.mxu0 1.0
        %249 = vmatprep.subr.mxu0 0.0
        %250 = vmatpush1.msra.mxu0 1.0
        %251 = vmatprep.subr.mxu0 0.0
        %252 = vmatpush1.msra.mxu0 1.0
        %253 = vmatprep.subr.mxu0 0.0
        %254 = vmatpush1.msra.mxu0 1.0
        %255 = vmatprep.subr.mxu0 0.0
        %256 = vmatpush1.msra.mxu0 1.0
        %257 = vmatprep.subr.mxu0 0.0
        %258 = vmatpush1.msra.mxu0 1.0
        %259 = vmatprep.subr.mxu0 0.0
        %260 = vmatpush1.msra.mxu0 1.0
        %261 = vmatprep.subr.mxu0 0.0
        %262 = vmatpush1.msra.mxu0 1.0
        %263 = vmatprep.subr.mxu0 0.0
        %264 = vmatpush1.msra.mxu0 1.0
        %265 = vmatprep.subr.mxu0 0.0
        %266 = vmatpush1.msra.mxu0 1.0
        %267 = vmatprep.subr.mxu0 0.0
        %268 = vmatpush1.msra.mxu0 1.0
        %269 = vmatprep.subr.mxu0 0.0
        %270 = vmatpush1.msra.mxu0 1.0
        %271 = vmatprep.subr.mxu0 0.0
        %272 = vmatpush1.msra.mxu0 1.0
        %273 = vmatprep.subr.mxu0 0.0
        %274 = vmatpush1.msra.mxu0 1.0
        %275 = vmatprep.subr.mxu0 0.0
        %276 = vmatpush1.msra.mxu0 1.0
        %277 = vmatprep.subr.mxu0 0.0
        %278 = vmatpush1.msra.mxu0 1.0
        %279 = vmatprep.subr.mxu0 0.0
        %280 = vmatpush1.msra.mxu0 1.0
        %281 = vmatprep.subr.mxu0 0.0
        %282 = vmatpush1.msra.mxu0 1.0
        %283 = vmatprep.subr.mxu0 0.0
        %284 = vmatpush1.msra.mxu0 1.0
        %285 = vmatprep.subr.mxu0 0.0
        %286 = vmatpush1.msra.mxu0 1.0
        %287 = vmatprep.subr.mxu0 0.0
        %288 = vmatpush1.msra.mxu0 1.0
        %289 = vmatprep.subr.mxu0 0.0
        %290 = vmatpush1.msra.mxu0 1.0
        %291 = vmatprep.subr.mxu0 0.0
        %292 = vmatpush1.msra.mxu0 1.0
        %293 = vmatprep.subr.mxu0 0.0
        %294 = vmatpush1.msra.mxu0 1.0
        %295 = vmatprep.subr.mxu0 0.0
        %296 = vmatpush1.msra.mxu0 1.0
        %297 = vmatprep.subr.mxu0 0.0
        %298 = vmatpush1.msra.mxu0 1.0
        %299 = vmatprep.subr.mxu0 0.0
        %300 = vmatpush1.msra.mxu0 1.0
        %301 = vmatprep.subr.mxu0 0.0
        %302 = vmatpush1.msra.mxu0 1.0
        %303 = vmatprep.subr.mxu0 0.0
        %304 = vmatpush1.msra.mxu0 1.0
        %305 = vmatprep.subr.mxu0 0.0
        %306 = vmatpush1.msra.mxu0 1.0
        %307 = vmatprep.subr.mxu0 0.0
        %308 = vmatpush1.msra.mxu0 1.0
        %309 = vmatprep.subr.mxu0 0.0
        %310 = vmatpush1.msra.mxu0 1.0
        %311 = vmatprep.mubr.f32.mxu0 %v245
        %312 = vmatmul.mubr.f32.gmra.mrb[0].mxu0 %v243
        %v313 = vpop.f32.mrb[0].mxu0
        %v314 = vadd.f32 0.0, %v313
        %v315 = vpop.f32.mrb[0].mxu0
        %316 = vdwg.mxu0
        %v317 = vmul.f32 %v314, 0.00390625
        %v318 = vld [vmem:[%s1] sm:$0x1]
        %v319 = vld [vmem:[#allocation2] sm:$0x1]
        %vm320 = vcmask 31744
        %v322 = vsel %vm320, %v318, 0
        %vm324 = vcmask 1043456
        %v326 = vsel %vm324, %v317, 0
        %328 = vmatprep.subr.mxu0 0.0
        %329 = vmatpush1.msra.mxu0 %v326
        %330 = vmatprep.subr.mxu0 0.0
        %331 = vmatpush1.msra.mxu0 0.0
        %332 = vmatprep.subr.mxu0 0.0
        %333 = vmatpush1.msra.mxu0 0.0
        %334 = vmatprep.subr.mxu0 0.0
        %335 = vmatpush1.msra.mxu0 0.0
        %336 = vmatprep.subr.mxu0 0.0
        %337 = vmatpush1.msra.mxu0 0.0
        %338 = vmatprep.subr.mxu0 0.0
        %339 = vmatpush1.msra.mxu0 0.0
        %340 = vmatprep.subr.mxu0 0.0
        %341 = vmatpush1.msra.mxu0 0.0
        %342 = vmatprep.subr.mxu0 0.0
        %343 = vmatpush1.msra.mxu0 0.0
        %344 = vmatprep.subr.mxu0 0.0
        %345 = vmatpush1.msra.mxu0 0.0
        %346 = vmatprep.subr.mxu0 0.0
        %347 = vmatpush1.msra.mxu0 0.0
        %348 = vmatprep.subr.mxu0 0.0
        %349 = vmatpush1.msra.mxu0 0.0
        %350 = vmatprep.subr.mxu0 0.0
        %351 = vmatpush1.msra.mxu0 0.0
        %352 = vmatprep.subr.mxu0 0.0
        %353 = vmatpush1.msra.mxu0 0.0
        %354 = vmatprep.subr.mxu0 0.0
        %355 = vmatpush1.msra.mxu0 0.0
        %356 = vmatprep.subr.mxu0 0.0
        %357 = vmatpush1.msra.mxu0 0.0
        %358 = vmatprep.subr.mxu0 0.0
        %359 = vmatpush1.msra.mxu0 0.0
        %360 = vmatprep.subr.mxu0 0.0
        %361 = vmatpush1.msra.mxu0 0.0
        %362 = vmatprep.subr.mxu0 0.0
        %363 = vmatpush1.msra.mxu0 0.0
        %364 = vmatprep.subr.mxu0 0.0
        %365 = vmatpush1.msra.mxu0 0.0
        %366 = vmatprep.subr.mxu0 0.0
        %367 = vmatpush1.msra.mxu0 0.0
        %368 = vmatprep.subr.mxu0 0.0
        %369 = vmatpush1.msra.mxu0 0.0
        %370 = vmatprep.subr.mxu0 0.0
        %371 = vmatpush1.msra.mxu0 0.0
        %372 = vmatprep.subr.mxu0 0.0
        %373 = vmatpush1.msra.mxu0 0.0
        %374 = vmatprep.subr.mxu0 0.0
        %375 = vmatpush1.msra.mxu0 0.0
        %376 = vmatprep.subr.mxu0 0.0
        %377 = vmatpush1.msra.mxu0 0.0
        %378 = vmatprep.subr.mxu0 0.0
        %379 = vmatpush1.msra.mxu0 0.0
        %380 = vmatprep.subr.mxu0 0.0
        %381 = vmatpush1.msra.mxu0 0.0
        %382 = vmatprep.subr.mxu0 0.0
        %383 = vmatpush1.msra.mxu0 0.0
        %384 = vmatprep.subr.mxu0 0.0
        %385 = vmatpush1.msra.mxu0 0.0
        %386 = vmatprep.subr.mxu0 0.0
        %387 = vmatpush1.msra.mxu0 0.0
        %388 = vmatprep.subr.mxu0 0.0
        %389 = vmatpush1.msra.mxu0 0.0
        %390 = vmatprep.subr.mxu0 0.0
        %391 = vmatpush1.msra.mxu0 0.0
        %392 = vmatprep.mubr.f32.mxu0 0.0
        %393 = vmatmul.mubr.f32.gmra.mrb[0].mxu0 %v322
        %v394 = vpop.f32.mrb[0].mxu0
        %v395 = vadd.f32 %v319, %v394
        %v396 = vpop.f32.mrb[0].mxu0
        %397 = vdwg.mxu0
        %v398 = vmax.f32 %v395, 0.0
        %v399 = vld [vmem:[%s3] sm:$0xf]
        %v400 = vld [vmem:[%s4] sm:$0xf]
        %vm401 = vcmask 7168
        %v403 = vsel %vm401, %v399, 0
        %vm405 = vcmask 1040384
        %v407 = vsel %vm405, %v398, 0
        %409 = vmatprep.subr.mxu0 0.0
        %410 = vmatpush1.msra.mxu0 %v407
        %411 = vmatprep.subr.mxu0 0.0
        %412 = vmatpush1.msra.mxu0 0.0
        %413 = vmatprep.subr.mxu0 0.0
        %414 = vmatpush1.msra.mxu0 0.0
        %415 = vmatprep.subr.mxu0 0.0
        %416 = vmatpush1.msra.mxu0 0.0
        %417 = vmatprep.subr.mxu0 0.0
        %418 = vmatpush1.msra.mxu0 0.0
        %419 = vmatprep.subr.mxu0 0.0
        %420 = vmatpush1.msra.mxu0 0.0
        %421 = vmatprep.subr.mxu0 0.0
        %422 = vmatpush1.msra.mxu0 0.0
        %423 = vmatprep.subr.mxu0 0.0
        %424 = vmatpush1.msra.mxu0 0.0
        %425 = vmatprep.subr.mxu0 0.0
        %426 = vmatpush1.msra.mxu0 0.0
        %427 = vmatprep.subr.mxu0 0.0
        %428 = vmatpush1.msra.mxu0 0.0
        %429 = vmatprep.subr.mxu0 0.0
        %430 = vmatpush1.msra.mxu0 0.0
        %431 = vmatprep.subr.mxu0 0.0
        %432 = vmatpush1.msra.mxu0 0.0
        %433 = vmatprep.subr.mxu0 0.0
        %434 = vmatpush1.msra.mxu0 0.0
        %435 = vmatprep.subr.mxu0 0.0
        %436 = vmatpush1.msra.mxu0 0.0
        %437 = vmatprep.subr.mxu0 0.0
        %438 = vmatpush1.msra.mxu0 0.0
        %439 = vmatprep.subr.mxu0 0.0
        %440 = vmatpush1.msra.mxu0 0.0
        %441 = vmatprep.subr.mxu0 0.0
        %442 = vmatpush1.msra.mxu0 0.0
        %443 = vmatprep.subr.mxu0 0.0
        %444 = vmatpush1.msra.mxu0 0.0
        %445 = vmatprep.subr.mxu0 0.0
        %446 = vmatpush1.msra.mxu0 0.0
        %447 = vmatprep.subr.mxu0 0.0
        %448 = vmatpush1.msra.mxu0 0.0
        %449 = vmatprep.subr.mxu0 0.0
        %450 = vmatpush1.msra.mxu0 0.0
        %451 = vmatprep.subr.mxu0 0.0
        %452 = vmatpush1.msra.mxu0 0.0
        %453 = vmatprep.subr.mxu0 0.0
        %454 = vmatpush1.msra.mxu0 0.0
        %455 = vmatprep.subr.mxu0 0.0
        %456 = vmatpush1.msra.mxu0 0.0
        %457 = vmatprep.subr.mxu0 0.0
        %458 = vmatpush1.msra.mxu0 0.0
        %459 = vmatprep.subr.mxu0 0.0
        %460 = vmatpush1.msra.mxu0 0.0
        %461 = vmatprep.subr.mxu0 0.0
        %462 = vmatpush1.msra.mxu0 0.0
        %463 = vmatprep.subr.mxu0 0.0
        %464 = vmatpush1.msra.mxu0 0.0
        %465 = vmatprep.subr.mxu0 0.0
        %466 = vmatpush1.msra.mxu0 0.0
        %467 = vmatprep.subr.mxu0 0.0
        %468 = vmatpush1.msra.mxu0 0.0
        %469 = vmatprep.subr.mxu0 0.0
        %470 = vmatpush1.msra.mxu0 0.0
        %471 = vmatprep.subr.mxu0 0.0
        %472 = vmatpush1.msra.mxu0 0.0
        %473 = vmatprep.mubr.f32.mxu0 0.0
        %474 = vmatmul.mubr.f32.gmra.mrb[0].mxu0 %v403
        %v475 = vpop.f32.mrb[0].mxu0
        %v476 = vadd.f32 %v400, %v475
        %v477 = vpop.f32.mrb[0].mxu0
        %478 = vdwg.mxu0
        %v479 = vadd.f32 %v476, 3.0
        %v480 = vmax.f32 %v479, 0.0
        %v481 = vmin.f32 %v480, 6.0
        %v482 = vmul.f32 %v481, 0.16666667
        %484 = vset.pattern.permute.xlu0 0
        %485 = vperm.xlu0 %484, %v482
        %v486 = vpop.permute.xlu0 %485
        %v488 = vunpack.c.l.s4 839922192
        %v489 = vunpack.c.0.s8 %v488
        %v490 = vlaneseq
        %v491 = vshrl.u32 %v490, 7
        %v492 = vsub.s32 %v489, %v491
        %v493 = vrot.slane %v486, %v492
        %v495 = vmul.f32 %v243, %v493
        %496 = vst [vmem:[%s242] sm:$0xff] %v495
        %s497 = sand.u32 %s142, 1
        %s498 = scalar_lea.sflag [#allocation5], %s497
        %s499 = sand.u32 %s142, 1
        %s500 = smul.addr %s499, 8
        %s501 = scalar_lea.vmem [#allocation6], %s500
        // Predicated region
        $region45: #{tpu_custom_call.1} parent=39 // pred_check
          %p502 = pneg %p152
        $region46: #{tpu_custom_call.1} parent=39 // pred_check_branch
          %504 = sbr.rel (%p502) target = $region48
        $region47: #{tpu_custom_call.1} parent=39 // pred_region
          %s506 = ssub.s32 128, 128
          %507 = vsyncadd %s498, %s506
          %s508 = smul.addr %s24, 2
          %s509 = smul.addr %s508, 64
          %s510 = scalar_lea.hbm %s5, %s509
          %s512 = sshll.u32 %s501, 4
          %s513 = int_to_ptr.vmem [resolvable:$true] %s512
          %515 = dma.vmem_to_hbm [thread:$0]  %s513, 128, %s510, %s498
        $region48: #{tpu_custom_call.1} parent=39 // pred_fallthru
          _
      $region40: #{tpu_custom_call.1} parent=5 // pred_fallthru
        _
      %p516 = scmp.le.s32.totalorder 2, %s19
      // Predicated region
      $region49: #{tpu_custom_call.1} parent=5 // pred_check
        %p517 = pneg %p516
      $region50: #{tpu_custom_call.1} parent=5 // pred_check_branch
        %519 = sbr.rel (%p517) target = $region52
      $region51: #{tpu_custom_call.1} parent=5 // pred_region
        %s520 = ssub.s32 %s19, 2
        // Predicated region
        $region53: #{tpu_custom_call.1} parent=51 // pred_check
          %p521 = pneg %p158
        $region54: #{tpu_custom_call.1} parent=51 // pred_check_branch
          %523 = sbr.rel (%p521) target = $region56
        $region55: #{tpu_custom_call.1} parent=51 // pred_region
          %s524 = sand.u32 %s143, 1
          %s525 = scalar_lea.sflag [#allocation5], %s524
          %s526 = sand.u32 %s143, 1
          %s527 = smul.addr %s526, 8
          %s528 = scalar_lea.vmem [#allocation6], %s527
          %529 = dma.done %s525, 128
        $region56: #{tpu_custom_call.1} parent=51 // pred_fallthru
          _
      $region52: #{tpu_custom_call.1} parent=5 // pred_fallthru
        _
    $region6: #{tpu_custom_call.1} parent=1 // loop_footer
      %s23 = sadd.s32 1, %s19
    $region7: #{tpu_custom_call.1} parent=1 // loop_footer_branch
      %18 = sbr.rel target = $region3
    $region8: #{tpu_custom_call.1} parent=1 // loop_exit
      _
    %530 = vsyncpa [#allocation4], 1
    %s531 = scalar_lea.sflag [#allocation4], 1
    %532 = vsyncpa %s531, 1
    %533 = vsyncpa [#allocation5], 1
    %s534 = scalar_lea.sflag [#allocation5], 1
    %535 = vsyncpa %s534, 1

</llo_original>
